<compile_context>
chip_gen: v7x
topology: tpu7x:2x2x1
jax: 0.10.0
libtpu: 0.0.40
codegen_flags: <defaults>
</compile_context>

<pallas_src>
import functools

import jax
import jax.numpy as jnp
from jax.experimental import pallas as pl
from jax.experimental.pallas import tpu as pltpu


# ----------------------------------------------------------------------------
# Attn: Pallas kernel
# ----------------------------------------------------------------------------
def _attn_kernel(q_ref, k_ref, seg_ref, o_ref, *, inv_temperature):
    """One batch tile.

    q_ref  : (block_b, hidden)          hidden = num_heads * head_dim
    k_ref  : (D, block_b, hidden)       native HBM layout of `keys`
    seg_ref: (hidden, num_heads)        block-diagonal ones (f32), resident
    o_ref  : (D, block_b, num_heads)    native output layout (no transposes)
    """
    D, bb, hidden = k_ref.shape
    num_heads = o_ref.shape[-1]

    # Fold 1/temperature into the small query operand; single f32 upcast so
    # bf16 inputs are supported while all math stays in f32.
    q = q_ref[...].astype(jnp.float32) * inv_temperature            # (bb, hidden)
    k = k_ref[...].astype(jnp.float32)                               # (D, bb, hidden)
    prod = k * q[None, :, :]                                         # lane-dense over hidden

    # Segment-sum over each head's head_dim chunk on the MXU: contract the
    # lane-dense product against a tiny (hidden, heads) block-diagonal ones
    # matrix.  The leading-dim collapse is tile-aligned because block_b % 8 == 0
    # (or block_b == B), so the reshape is free.
    scores = jax.lax.dot_general(
        prod.reshape(D * bb, hidden), seg_ref[...],
        dimension_numbers=(((1,), (0,)), ((), ())),
        preferred_element_type=jnp.float32)                          # (D*bb, heads)
    s = scores.reshape(D, bb, num_heads)

    # Softmax over the leading D axis: pure element-wise VPU work across D
    # vregs — no XLU transposes, no lane reductions.
    m = jnp.max(s, axis=0, keepdims=True)
    p = jnp.exp(s - m)
    denom = jnp.sum(p, axis=0, keepdims=True)
    o_ref[...] = (p / denom).astype(o_ref.dtype)                     # exact divide


def _vmem_capacity_bytes():
    """Per-TensorCore VMEM capacity (128 MiB on v5e/v6e, 64 MiB on v7x)."""
    default = 128 * 2**20
    try:
        cap = getattr(pltpu.get_tpu_info(), "vmem_capacity_bytes", None)
        return int(cap) if cap else default
    except Exception:
        return default


def _per_batch_row_bytes(D, hidden, num_heads, key_itemsize, q_itemsize):
    """VMEM bytes needed per batch row inside one grid step (incl. f32 temps)."""
    keys_blk = 2 * D * hidden * key_itemsize        # double-buffered keys block
    f32_tmp = 2 * D * hidden * 4                    # f32 upcast + product intermediates
    q_blk = 2 * hidden * q_itemsize                 # double-buffered query block
    out_blk = 2 * D * num_heads * 4                 # double-buffered output block
    return keys_blk + f32_tmp + q_blk + out_blk


def _pick_block_b(B, per_row_bytes, budget_bytes, granule, *, prefer_multi_step):
    """Largest dtype-granule batch tile whose working set fits the VMEM budget."""
    cap_rows = budget_bytes // max(per_row_bytes, 1)
    if not prefer_multi_step and B <= max(cap_rows, granule):
        return B                                    # small problem: grid=(1,)
    target = min(B, max(cap_rows, granule))
    if prefer_multi_step:
        target = min(target, max(granule, B // 2))  # >=2 grid steps (v7x megacore)
    bb = max(granule, (target // granule) * granule)
    while bb >= granule:
        if B % bb == 0:
            return bb
        bb -= granule
    # TODO(synk): if even the smallest granule-multiple block blows the budget
    # (huge D*hidden), add a D grid axis with an online softmax instead.
    return B


def attn_forward(query, keys, *, num_heads, temperature=1.0, block_b=None):
    """Pallas equivalent of Attn(num_heads, temperature).forward(query, keys)."""
    B, hidden = query.shape
    D, B2, hidden2 = keys.shape
    assert B2 == B and hidden2 == hidden
    assert hidden % num_heads == 0
    head_dim = hidden // num_heads
    k_item = jnp.dtype(keys.dtype).itemsize
    q_item = jnp.dtype(query.dtype).itemsize

    vmem_cap = _vmem_capacity_bytes()
    budget = int(0.30 * vmem_cap)       # ~38 MiB on v5e/v6e (128 MiB), ~19 MiB on v7x (64 MiB)
    per_row = _per_batch_row_bytes(D, hidden, num_heads, k_item, q_item)
    granule = max(8, 32 // min(k_item, q_item))     # 8 for f32, 16 for bf16, 32 for int8

    if block_b is None:
        # Small problems: a single grid step (per-step fixed cost dominates).
        # Big problems: at least 2 steps so the "parallel" batch axis can shard
        # across v7x's 2 TensorCores and the strided keys DMA pipelines.
        prefer_multi = (B * per_row > 4 * 2**20) and (B >= 2 * granule)
        block_b = _pick_block_b(B, per_row, budget, granule,
                                prefer_multi_step=prefer_multi)
    assert B % block_b == 0, (B, block_b)
    assert block_b == B or block_b % 8 == 0, block_b
    grid = (B // block_b,)

    # Tiny block-diagonal ones matrix for the MXU segment-sum; stays resident.
    seg = (jnp.arange(hidden, dtype=jnp.int32)[:, None] // head_dim
           == jnp.arange(num_heads, dtype=jnp.int32)[None, :]).astype(jnp.float32)

    # VMEM sizing includes the f32 intermediates; cap at 70% of physical VMEM
    # (never request the whole 64 MiB on v7x).
    block_bytes = block_b * per_row + hidden * num_heads * 4
    vmem_limit = int(min(int(0.7 * vmem_cap),
                         max(16 * 2**20, block_bytes + 4 * 2**20)))

    flops = int(D * B * hidden                      # scaled product
                + 2 * D * B * hidden * num_heads    # MXU segment-sum
                + 6 * D * B * num_heads)            # softmax
    transcendentals = int(D * B * num_heads)
    bytes_accessed = int(keys.size * k_item + query.size * q_item
                         + seg.size * 4 + D * B * num_heads * 4)

    kernel = functools.partial(_attn_kernel, inv_temperature=1.0 / float(temperature))

    # Output is produced natively in (D, B, heads) layout — no wrapper transpose.
    return pl.pallas_call(
        kernel,
        out_shape=jax.ShapeDtypeStruct((D, B, num_heads), jnp.float32),
        grid=grid,
        in_specs=[
            pl.BlockSpec((block_b, hidden), lambda i: (i, 0)),
            pl.BlockSpec((D, block_b, hidden), lambda i: (0, i, 0)),  # native keys layout
            pl.BlockSpec((hidden, num_heads), lambda i: (0, 0)),      # resident constant
        ],
        out_specs=pl.BlockSpec((D, block_b, num_heads), lambda i: (0, i, 0)),
        compiler_params=pltpu.CompilerParams(
            dimension_semantics=("parallel",),
            vmem_limit_bytes=vmem_limit,
        ),
        cost_estimate=pl.CostEstimate(
            flops=flops, transcendentals=transcendentals, bytes_accessed=bytes_accessed
        ),
    )(query, keys, seg)


# ----------------------------------------------------------------------------
# Full AttnLayer forward (Squeeze + concat + Attn kernel + weighted sum)
# ----------------------------------------------------------------------------
def _squeeze_forward(x, gamma):
    # AdaptiveAvgPool1d((1,)) + Flatten + LayerScaler(hidden_dim, init_scale)
    return jnp.mean(x, axis=-1) * gamma                         # (B, hidden)


def attn_layer_forward(xs, all_squeezed, gamma, *, num_heads, query_idx=-1,
                       temperature=1.0, block_b=None):
    """xs: (D, B, hidden, S), all_squeezed: (D-1, B, hidden), gamma: (hidden,)."""
    squeezed = _squeeze_forward(xs[-1], gamma)[None]            # (1, B, hidden)
    all_squeezed = jnp.concatenate([all_squeezed, squeezed], axis=0)   # (D, B, hidden)
    query = all_squeezed[query_idx]                             # (B, hidden)
    attended = attn_forward(query, all_squeezed, num_heads=num_heads,
                            temperature=temperature, block_b=block_b)  # (D, B, heads)
    D, B, hidden, S = xs.shape
    hd = hidden // num_heads
    # TODO(synk): the weighted sum over D (the layer-level bandwidth hog over xs)
    # is left to XLA, which fuses the broadcast+multiply+reduce into a single
    # pass over xs; a dedicated Pallas kernel could fuse the avg-pool squeeze too.
    x_new = jnp.einsum("dbehs,dbe->behs", xs.reshape(D, B, num_heads, hd, S), attended)
    return x_new.reshape(B, hidden, S), all_squeezed


# ----------------------------------------------------------------------------
# Pure-JAX references
# ----------------------------------------------------------------------------
def _attn_reference(query, keys, *, num_heads, temperature=1.0):
    B, hidden = query.shape
    D = keys.shape[0]
    hd = hidden // num_heads
    q = query.reshape(B, num_heads, hd).astype(jnp.float32)
    k = keys.reshape(D, B, num_heads, hd).astype(jnp.float32)
    attn = jnp.einsum("beh,dbeh->dbe", q, k) / temperature
    return jax.nn.softmax(attn, axis=0)


def _attn_layer_reference(xs, all_squeezed, gamma, *, num_heads, query_idx=-1,
                          temperature=1.0):
    squeezed = _squeeze_forward(xs[-1], gamma)[None]
    all_squeezed = jnp.concatenate([all_squeezed, squeezed], axis=0)
    query = all_squeezed[query_idx]
    attended = _attn_reference(query, all_squeezed, num_heads=num_heads,
                               temperature=temperature)
    D, B, hidden, S = xs.shape
    hd = hidden // num_heads
    x_new = jnp.einsum("dbehs,dbe->behs", xs.reshape(D, B, num_heads, hd, S), attended)
    return x_new.reshape(B, hidden, S), all_squeezed


if __name__ == "__main__":
    # Small shapes consistent with the module's forward.
    B, num_heads, head_dim, D, S = 16, 4, 8, 8, 16
    hidden = num_heads * head_dim
    temperature = 1.5

    key = jax.random.PRNGKey(0)
    k1, k2, k3, k4 = jax.random.split(key, 4)
    query = jax.random.normal(k1, (B, hidden), dtype=jnp.float32)
    keys = jax.random.normal(k2, (D, B, hidden), dtype=jnp.float32)

    ref = _attn_reference(query, keys, num_heads=num_heads, temperature=temperature)

    # --- Attn kernel, f32, auto block (small problem -> grid=(1,)) ---
    out = attn_forward(query, keys, num_heads=num_heads, temperature=temperature)
    out = jax.block_until_ready(out)
    assert out.shape == (D, B, num_heads)
    # tolerance covers the MXU f32 pass decomposition of the segment-sum matmul
    assert jnp.allclose(out, ref, atol=1e-2, rtol=1e-2), float(jnp.max(jnp.abs(out - ref)))

    # --- Attn kernel, f32, explicit block_b=8 -> grid=(2,): exercises pipelining ---
    out_t = attn_forward(query, keys, num_heads=num_heads, temperature=temperature,
                         block_b=8)
    out_t = jax.block_until_ready(out_t)
    assert jnp.allclose(out_t, ref, atol=1e-2, rtol=1e-2)

    # --- Attn kernel, bf16 inputs (halved HBM traffic), f32 accumulation ---
    out_bf16 = attn_forward(query.astype(jnp.bfloat16), keys.astype(jnp.bfloat16),
                            num_heads=num_heads, temperature=temperature)
    out_bf16 = jax.block_until_ready(out_bf16)
    ref_bf16 = _attn_reference(query.astype(jnp.bfloat16).astype(jnp.float32),
                               keys.astype(jnp.bfloat16).astype(jnp.float32),
                               num_heads=num_heads, temperature=temperature)
    assert jnp.allclose(out_bf16, ref_bf16, atol=1e-2, rtol=1e-2)

    # --- Full AttnLayer forward ---
    xs = jax.random.normal(k3, (D, B, hidden, S), dtype=jnp.float32)
    all_squeezed_prev = jax.random.normal(k4, (D - 1, B, hidden), dtype=jnp.float32)
    gamma = jnp.full((hidden,), 1.0, dtype=jnp.float32)     # LayerScaler(init_scale=1.0)

    x_new, all_sq = attn_layer_forward(xs, all_squeezed_prev, gamma,
                                       num_heads=num_heads, temperature=temperature)
    x_new = jax.block_until_ready(x_new)
    x_new_ref, all_sq_ref = _attn_layer_reference(xs, all_squeezed_prev, gamma,
                                                  num_heads=num_heads,
                                                  temperature=temperature)
    assert x_new.shape == (B, hidden, S)
    assert all_sq.shape == (D, B, hidden)
    assert jnp.allclose(all_sq, all_sq_ref, atol=1e-5, rtol=1e-5)
    assert jnp.allclose(x_new, x_new_ref, atol=5e-2, rtol=5e-2), \
        float(jnp.max(jnp.abs(x_new - x_new_ref)))

    print("KERNEL_OK")
</pallas_src>

<mosaic_0001>
module attributes {stable_mosaic.version = 11 : i64} {
  func.func @_attn_kernel(%arg0: i32, %arg1: memref<16x32xf32, #tpu.memory_space<vmem>>, %arg2: memref<8x16x32xf32, #tpu.memory_space<vmem>>, %arg3: memref<32x4xf32, #tpu.memory_space<vmem>>, %arg4: memref<8x16x4xf32, #tpu.memory_space<vmem>>) attributes {dimension_semantics = [#tpu.dimension_semantics<parallel>], iteration_bounds = array<i64: 1>, scalar_prefetch = 0 : i64, scratch_operands = 0 : i64, tpu.core_type = #tpu.core_type<tc>, window_params = [{transform_indices = @transform_0, window_bounds = array<i64: 16, 32>}, {transform_indices = @transform_1, window_bounds = array<i64: 8, 16, 32>}, {pipeline_mode = #tpu.pipeline_mode<synchronous>, transform_indices = @transform_2, window_bounds = array<i64: 32, 4>}, {transform_indices = @transform_3, window_bounds = array<i64: 8, 16, 4>}]} {
    %c0 = arith.constant 0 : index
    %c0_0 = arith.constant 0 : index
    %0 = vector.load %arg1[%c0, %c0_0] : memref<16x32xf32, #tpu.memory_space<vmem>>, vector<16x32xf32>
    %cst = arith.constant 0.666666686 : f32
    %1 = vector.broadcast %cst : f32 to vector<16x32xf32>
    %2 = arith.mulf %0, %1 : vector<16x32xf32>
    %c0_1 = arith.constant 0 : index
    %c0_2 = arith.constant 0 : index
    %c0_3 = arith.constant 0 : index
    %3 = vector.load %arg2[%c0_1, %c0_2, %c0_3] : memref<8x16x32xf32, #tpu.memory_space<vmem>>, vector<8x16x32xf32>
    %4 = vector.shape_cast %2 : vector<16x32xf32> to vector<1x16x32xf32>
    %5 = vector.broadcast %4 : vector<1x16x32xf32> to vector<8x16x32xf32>
    %6 = arith.mulf %3, %5 : vector<8x16x32xf32>
    %7 = vector.shape_cast %6 : vector<8x16x32xf32> to vector<128x32xf32>
    %c0_4 = arith.constant 0 : index
    %c0_5 = arith.constant 0 : index
    %8 = vector.load %arg3[%c0_4, %c0_5] : memref<32x4xf32, #tpu.memory_space<vmem>>, vector<32x4xf32>
    %cst_6 = arith.constant dense<0.000000e+00> : vector<128x4xf32>
    %9 = tpu.matmul %7, %8, %cst_6 {dimension_numbers = #tpu.dot_dimension_numbers<[1], [0], [0], [1], [0, 0, 1, 1], [], []>} : vector<128x32xf32>, vector<32x4xf32>, vector<128x4xf32> -> vector<128x4xf32>
    %10 = vector.shape_cast %9 : vector<128x4xf32> to vector<8x16x4xf32>
    %cst_7 = arith.constant dense<0xFF800000> : vector<16x4xf32>
    %11 = vector.multi_reduction <maximumf>, %10, %cst_7 [0] : vector<8x16x4xf32> to vector<16x4xf32>
    %12 = vector.shape_cast %11 : vector<16x4xf32> to vector<1x16x4xf32>
    %13 = vector.broadcast %12 : vector<1x16x4xf32> to vector<8x16x4xf32>
    %14 = arith.subf %10, %13 : vector<8x16x4xf32>
    %15 = math.exp %14 : vector<8x16x4xf32>
    %cst_8 = arith.constant dense<0.000000e+00> : vector<16x4xf32>
    %16 = vector.multi_reduction <add>, %15, %cst_8 [0] : vector<8x16x4xf32> to vector<16x4xf32>
    %17 = vector.shape_cast %16 : vector<16x4xf32> to vector<1x16x4xf32>
    %18 = vector.broadcast %17 : vector<1x16x4xf32> to vector<8x16x4xf32>
    %19 = arith.divf %15, %18 : vector<8x16x4xf32>
    %c0_9 = arith.constant 0 : index
    %c0_10 = arith.constant 0 : index
    %c0_11 = arith.constant 0 : index
    %20 = vector.load %arg4[%c0_9, %c0_10, %c0_11] : memref<8x16x4xf32, #tpu.memory_space<vmem>>, vector<8x16x4xf32>
    tpu.vector_store %arg4[%c0_9, %c0_10, %c0_11], %19 {strides = array<i32>} : memref<8x16x4xf32, #tpu.memory_space<vmem>>, vector<8x16x4xf32>,
    return
  }
  func.func @transform_0(%arg0: i32) -> (i32, i32) {
    %c0_i32 = arith.constant 0 : i32
    %c0_i32_0 = arith.constant 0 : i32
    return %arg0, %c0_i32 : i32, i32
  }
  func.func @transform_1(%arg0: i32) -> (i32, i32, i32) {
    %c0_i32 = arith.constant 0 : i32
    %c0_i32_0 = arith.constant 0 : i32
    %c0_i32_1 = arith.constant 0 : i32
    return %c0_i32, %arg0, %c0_i32_0 : i32, i32, i32
  }
  func.func @transform_2(%arg0: i32) -> (i32, i32) {
    %c0_i32 = arith.constant 0 : i32
    %c0_i32_0 = arith.constant 0 : i32
    %c0_i32_1 = arith.constant 0 : i32
    return %c0_i32, %c0_i32_0 : i32, i32
  }
  func.func @transform_3(%arg0: i32) -> (i32, i32, i32) {
    %c0_i32 = arith.constant 0 : i32
    %c0_i32_0 = arith.constant 0 : i32
    %c0_i32_1 = arith.constant 0 : i32
    return %c0_i32, %arg0, %c0_i32_0 : i32, i32, i32
  }
}

</mosaic_0001>

<llo_original>
// kernel: tpu_custom_call.1
$region0: #{tpu_custom_call.1}
  #allocation0 [shape = 'u32[]', space=smem, size = 0x4, offset = 0x4, fixed_abs, tag = 'smem constant byte address 0x4 - core index']
  #allocation1 [shape = 'u32[144,128]{1,0:T(1,128)}', space=vmem, size = 0x12000, scoped, tag = 'internal scratch']
  %s0 = inlined_call_operand.vmem [shape: f32[16,32], index: 0, kind: input, shape index: {}]
  %s1 = inlined_call_operand.hbm [shape: f32[8,16,32], index: 1, kind: input, shape index: {}]
  %s2 = inlined_call_operand.vmem [shape: f32[32,4], index: 2, kind: input, shape index: {}]
  %s3 = inlined_call_operand.vmem [shape: f32[8,16,4], index: 3, kind: output, shape index: {}]
  %s4 = sld [smem:[#allocation0]]
  $region26: #{tpu_custom_call.1} parent=0
    _
  %s6 = ssub.s32 1, %s4
  %s7 = scalar_select 0, %s6, %s4
  $region1: #{tpu_custom_call.1} parent=0
    #allocation2 [shape = 'u8[65536]{0}', space=vmem, size = 0x10000, scoped, tag = 'input window, operand 1, single buffered']
    #allocation3 [shape = 's32[1]{0}', space=sflag, size = 0x4, scoped, tag = 'scoped memory for tpu_custom_call.1']
    %8 = vsyncpa [#allocation3], 0
    // Predicated region
    $region2: #{tpu_custom_call.1} parent=1 // pred_check
      _
    $region3: #{tpu_custom_call.1} parent=1 // pred_check_branch
      %10 = sbr.rel (0) target = $region5
    $region4: #{tpu_custom_call.1} parent=1 // pred_region
      _
    $region5: #{tpu_custom_call.1} parent=1 // pred_fallthru
      _
    // Predicated region
    $region6: #{tpu_custom_call.1} parent=1 // pred_check
      _
    $region7: #{tpu_custom_call.1} parent=1 // pred_check_branch
      %12 = sbr.rel (0) target = $region9
    $region8: #{tpu_custom_call.1} parent=1 // pred_region
      %s14 = ssub.s32 2048, 2048
      %15 = vsyncadd [#allocation3], %s14
      %s16 = sshll.u32 [#allocation2], 4
      %s17 = int_to_ptr.vmem [resolvable:$true] %s16
      %22 = dma.hbm_to_vmem [thread:$0]  %s1, 2048, %s17, [#allocation3], 128, 128, 8
    $region9: #{tpu_custom_call.1} parent=1 // pred_fallthru
      _
    // Predicated region
    $region10: #{tpu_custom_call.1} parent=1 // pred_check
      _
    $region11: #{tpu_custom_call.1} parent=1 // pred_check_branch
      %24 = sbr.rel (0) target = $region13
    $region12: #{tpu_custom_call.1} parent=1 // pred_region
      _
    $region13: #{tpu_custom_call.1} parent=1 // pred_fallthru
      _
    // Predicated region
    $region14: #{tpu_custom_call.1} parent=1 // pred_check
      _
    $region15: #{tpu_custom_call.1} parent=1 // pred_check_branch
      %26 = sbr.rel (0) target = $region17
    $region16: #{tpu_custom_call.1} parent=1 // pred_region
      %27 = dma.done [#allocation3], 2048
    $region17: #{tpu_custom_call.1} parent=1 // pred_fallthru
      _
    %v28 = vld [vmem:[%s0] sm:$0xff]
    %v29 = vld [vmem:[%s0 + $0x8] sm:$0xff]
    %v30 = vmul.f32 %v28, 0.6666667
    %v31 = vmul.f32 %v29, 0.6666667
    %v32 = vld [vmem:[#allocation2] sm:$0xff]
    %v33 = vld [vmem:[#allocation2 + $0x8] sm:$0xff]
    %v34 = vld [vmem:[#allocation2 + $0x10] sm:$0xff]
    %v35 = vld [vmem:[#allocation2 + $0x18] sm:$0xff]
    %v36 = vld [vmem:[#allocation2 + $0x20] sm:$0xff]
    %v37 = vld [vmem:[#allocation2 + $0x28] sm:$0xff]
    %v38 = vld [vmem:[#allocation2 + $0x30] sm:$0xff]
    %v39 = vld [vmem:[#allocation2 + $0x38] sm:$0xff]
    %v40 = vld [vmem:[#allocation2 + $0x40] sm:$0xff]
    %v41 = vld [vmem:[#allocation2 + $0x48] sm:$0xff]
    %v42 = vld [vmem:[#allocation2 + $0x50] sm:$0xff]
    %v43 = vld [vmem:[#allocation2 + $0x58] sm:$0xff]
    %v44 = vld [vmem:[#allocation2 + $0x60] sm:$0xff]
    %v45 = vld [vmem:[#allocation2 + $0x68] sm:$0xff]
    %v46 = vld [vmem:[#allocation2 + $0x70] sm:$0xff]
    %v47 = vld [vmem:[#allocation2 + $0x78] sm:$0xff]
    %v48 = vmul.f32 %v32, %v30
    %v49 = vmul.f32 %v33, %v31
    %v50 = vmul.f32 %v34, %v30
    %v51 = vmul.f32 %v35, %v31
    %v52 = vmul.f32 %v36, %v30
    %v53 = vmul.f32 %v37, %v31
    %v54 = vmul.f32 %v38, %v30
    %v55 = vmul.f32 %v39, %v31
    %v56 = vmul.f32 %v40, %v30
    %v57 = vmul.f32 %v41, %v31
    %v58 = vmul.f32 %v42, %v30
    %v59 = vmul.f32 %v43, %v31
    %v60 = vmul.f32 %v44, %v30
    %v61 = vmul.f32 %v45, %v31
    %v62 = vmul.f32 %v46, %v30
    %v63 = vmul.f32 %v47, %v31
    %v64 = vld [vmem:[%s2] sm:$0xff]
    %v65 = vld [vmem:[%s2 + $0x8] sm:$0xff]
    %v66 = vld [vmem:[%s2 + $0x10] sm:$0xff]
    %v67 = vld [vmem:[%s2 + $0x18] sm:$0xff]
    %vm68 = vcmask 261120
    %v70 = vsel %vm68, %v48, 0
    %v73 = vsel %vm68, %v49, 0
    %v76 = vsel %vm68, %v50, 0
    %v79 = vsel %vm68, %v51, 0
    %v82 = vsel %vm68, %v52, 0
    %v85 = vsel %vm68, %v53, 0
    %v88 = vsel %vm68, %v54, 0
    %v91 = vsel %vm68, %v55, 0
    %v94 = vsel %vm68, %v56, 0
    %v97 = vsel %vm68, %v57, 0
    %v100 = vsel %vm68, %v58, 0
    %v103 = vsel %vm68, %v59, 0
    %v106 = vsel %vm68, %v60, 0
    %v109 = vsel %vm68, %v61, 0
    %v112 = vsel %vm68, %v62, 0
    %v115 = vsel %vm68, %v63, 0
    %117 = vmatprep.subr.mxu0 0.0
    %118 = vmatpush1.msra.mxu0 %v64
    %119 = vmatprep.subr.mxu0 0.0
    %120 = vmatpush1.msra.mxu0 %v65
    %121 = vmatprep.subr.mxu0 0.0
    %122 = vmatpush1.msra.mxu0 %v66
    %123 = vmatprep.subr.mxu0 0.0
    %124 = vmatpush1.msra.mxu0 %v67
    %125 = vmatprep.subr.mxu0 0.0
    %126 = vmatpush1.msra.mxu0 0.0
    %127 = vmatprep.subr.mxu0 0.0
    %128 = vmatpush1.msra.mxu0 0.0
    %129 = vmatprep.subr.mxu0 0.0
    %130 = vmatpush1.msra.mxu0 0.0
    %131 = vmatprep.subr.mxu0 0.0
    %132 = vmatpush1.msra.mxu0 0.0
    %133 = vmatprep.subr.mxu0 0.0
    %134 = vmatpush1.msra.mxu0 0.0
    %135 = vmatprep.subr.mxu0 0.0
    %136 = vmatpush1.msra.mxu0 0.0
    %137 = vmatprep.subr.mxu0 0.0
    %138 = vmatpush1.msra.mxu0 0.0
    %139 = vmatprep.subr.mxu0 0.0
    %140 = vmatpush1.msra.mxu0 0.0
    %141 = vmatprep.subr.mxu0 0.0
    %142 = vmatpush1.msra.mxu0 0.0
    %143 = vmatprep.subr.mxu0 0.0
    %144 = vmatpush1.msra.mxu0 0.0
    %145 = vmatprep.subr.mxu0 0.0
    %146 = vmatpush1.msra.mxu0 0.0
    %147 = vmatprep.subr.mxu0 0.0
    %148 = vmatpush1.msra.mxu0 0.0
    %149 = vmatprep.subr.mxu0 0.0
    %150 = vmatpush1.msra.mxu0 0.0
    %151 = vmatprep.subr.mxu0 0.0
    %152 = vmatpush1.msra.mxu0 0.0
    %153 = vmatprep.subr.mxu0 0.0
    %154 = vmatpush1.msra.mxu0 0.0
    %155 = vmatprep.subr.mxu0 0.0
    %156 = vmatpush1.msra.mxu0 0.0
    %157 = vmatprep.subr.mxu0 0.0
    %158 = vmatpush1.msra.mxu0 0.0
    %159 = vmatprep.subr.mxu0 0.0
    %160 = vmatpush1.msra.mxu0 0.0
    %161 = vmatprep.subr.mxu0 0.0
    %162 = vmatpush1.msra.mxu0 0.0
    %163 = vmatprep.subr.mxu0 0.0
    %164 = vmatpush1.msra.mxu0 0.0
    %165 = vmatprep.subr.mxu0 0.0
    %166 = vmatpush1.msra.mxu0 0.0
    %167 = vmatprep.subr.mxu0 0.0
    %168 = vmatpush1.msra.mxu0 0.0
    %169 = vmatprep.subr.mxu0 0.0
    %170 = vmatpush1.msra.mxu0 0.0
    %171 = vmatprep.subr.mxu0 0.0
    %172 = vmatpush1.msra.mxu0 0.0
    %173 = vmatprep.subr.mxu0 0.0
    %174 = vmatpush1.msra.mxu0 0.0
    %175 = vmatprep.subr.mxu0 0.0
    %176 = vmatpush1.msra.mxu0 0.0
    %177 = vmatprep.subr.mxu0 0.0
    %178 = vmatpush1.msra.mxu0 0.0
    %179 = vmatprep.subr.mxu0 0.0
    %180 = vmatpush1.msra.mxu0 0.0
    %181 = vmatprep.mubr.f32.mxu0 0.0
    %182 = vmatmul.mubr.f32.gmra.mrb[0].mxu0 %v70
    %v183 = vpop.f32.mrb[0].mxu0
    %v184 = vadd.f32 0.0, %v183
    %v185 = vpop.f32.mrb[0].mxu0
    %186 = vmatprep.mubr.f32.mxu0 0.0
    %187 = vmatmul.mubr.f32.gmra.mrb[0].mxu0 %v73
    %v188 = vpop.f32.mrb[0].mxu0
    %v189 = vadd.f32 0.0, %v188
    %v190 = vpop.f32.mrb[0].mxu0
    %191 = vmatprep.mubr.f32.mxu0 0.0
    %192 = vmatmul.mubr.f32.gmra.mrb[0].mxu0 %v76
    %v193 = vpop.f32.mrb[0].mxu0
    %v194 = vadd.f32 0.0, %v193
    %v195 = vpop.f32.mrb[0].mxu0
    %196 = vmatprep.mubr.f32.mxu0 0.0
    %197 = vmatmul.mubr.f32.gmra.mrb[0].mxu0 %v79
    %v198 = vpop.f32.mrb[0].mxu0
    %v199 = vadd.f32 0.0, %v198
    %v200 = vpop.f32.mrb[0].mxu0
    %201 = vmatprep.mubr.f32.mxu0 0.0
    %202 = vmatmul.mubr.f32.gmra.mrb[0].mxu0 %v82
    %v203 = vpop.f32.mrb[0].mxu0
    %v204 = vadd.f32 0.0, %v203
    %v205 = vpop.f32.mrb[0].mxu0
    %206 = vmatprep.mubr.f32.mxu0 0.0
    %207 = vmatmul.mubr.f32.gmra.mrb[0].mxu0 %v85
    %v208 = vpop.f32.mrb[0].mxu0
    %v209 = vadd.f32 0.0, %v208
    %v210 = vpop.f32.mrb[0].mxu0
    %211 = vmatprep.mubr.f32.mxu0 0.0
    %212 = vmatmul.mubr.f32.gmra.mrb[0].mxu0 %v88
    %v213 = vpop.f32.mrb[0].mxu0
    %v214 = vadd.f32 0.0, %v213
    %v215 = vpop.f32.mrb[0].mxu0
    %216 = vmatprep.mubr.f32.mxu0 0.0
    %217 = vmatmul.mubr.f32.gmra.mrb[0].mxu0 %v91
    %v218 = vpop.f32.mrb[0].mxu0
    %v219 = vadd.f32 0.0, %v218
    %v220 = vpop.f32.mrb[0].mxu0
    %221 = vmatprep.mubr.f32.mxu0 0.0
    %222 = vmatmul.mubr.f32.gmra.mrb[0].mxu0 %v94
    %v223 = vpop.f32.mrb[0].mxu0
    %v224 = vadd.f32 0.0, %v223
    %v225 = vpop.f32.mrb[0].mxu0
    %226 = vmatprep.mubr.f32.mxu0 0.0
    %227 = vmatmul.mubr.f32.gmra.mrb[0].mxu0 %v97
    %v228 = vpop.f32.mrb[0].mxu0
    %v229 = vadd.f32 0.0, %v228
    %v230 = vpop.f32.mrb[0].mxu0
    %231 = vmatprep.mubr.f32.mxu0 0.0
    %232 = vmatmul.mubr.f32.gmra.mrb[0].mxu0 %v100
    %v233 = vpop.f32.mrb[0].mxu0
    %v234 = vadd.f32 0.0, %v233
    %v235 = vpop.f32.mrb[0].mxu0
    %236 = vmatprep.mubr.f32.mxu0 0.0
    %237 = vmatmul.mubr.f32.gmra.mrb[0].mxu0 %v103
    %v238 = vpop.f32.mrb[0].mxu0
    %v239 = vadd.f32 0.0, %v238
    %v240 = vpop.f32.mrb[0].mxu0
    %241 = vmatprep.mubr.f32.mxu0 0.0
    %242 = vmatmul.mubr.f32.gmra.mrb[0].mxu0 %v106
    %v243 = vpop.f32.mrb[0].mxu0
    %v244 = vadd.f32 0.0, %v243
    %v245 = vpop.f32.mrb[0].mxu0
    %246 = vmatprep.mubr.f32.mxu0 0.0
    %247 = vmatmul.mubr.f32.gmra.mrb[0].mxu0 %v109
    %v248 = vpop.f32.mrb[0].mxu0
    %v249 = vadd.f32 0.0, %v248
    %v250 = vpop.f32.mrb[0].mxu0
    %251 = vmatprep.mubr.f32.mxu0 0.0
    %252 = vmatmul.mubr.f32.gmra.mrb[0].mxu0 %v112
    %v253 = vpop.f32.mrb[0].mxu0
    %v254 = vadd.f32 0.0, %v253
    %v255 = vpop.f32.mrb[0].mxu0
    %256 = vmatprep.mubr.f32.mxu0 0.0
    %257 = vmatmul.mubr.f32.gmra.mrb[0].mxu0 %v115
    %v258 = vpop.f32.mrb[0].mxu0
    %v259 = vadd.f32 0.0, %v258
    %v260 = vpop.f32.mrb[0].mxu0
    %261 = vdwg.mxu0
    %vm262 = vcmask 31744
    %v263 = vsel %vm262, %v184, -inf
    %v264 = vsel %vm262, %v194, -inf
    %v265 = vsel %vm262, %v204, -inf
    %v266 = vmax.f32 %v263, %v265
    %v267 = vsel %vm262, %v214, -inf
    %v268 = vmax.f32 %v264, %v267
    %v269 = vsel %vm262, %v224, -inf
    %v270 = vmax.f32 %v266, %v269
    %v271 = vsel %vm262, %v234, -inf
    %v272 = vmax.f32 %v268, %v271
    %v273 = vsel %vm262, %v244, -inf
    %v274 = vmax.f32 %v270, %v273
    %v275 = vsel %vm262, %v254, -inf
    %v276 = vmax.f32 %v272, %v275
    %v277 = vmax.f32 %v274, %v276
    %v278 = vsel %vm262, %v189, -inf
    %v279 = vsel %vm262, %v199, -inf
    %v280 = vsel %vm262, %v209, -inf
    %v281 = vmax.f32 %v278, %v280
    %v282 = vsel %vm262, %v219, -inf
    %v283 = vmax.f32 %v279, %v282
    %v284 = vsel %vm262, %v229, -inf
    %v285 = vmax.f32 %v281, %v284
    %v286 = vsel %vm262, %v239, -inf
    %v287 = vmax.f32 %v283, %v286
    %v288 = vsel %vm262, %v249, -inf
    %v289 = vmax.f32 %v285, %v288
    %v290 = vsel %vm262, %v259, -inf
    %v291 = vmax.f32 %v287, %v290
    %v292 = vmax.f32 %v289, %v291
    %v293 = vsub.f32 %v184, %v277
    %v294 = vsub.f32 %v189, %v292
    %v295 = vsub.f32 %v194, %v277
    %v296 = vsub.f32 %v199, %v292
    %v297 = vsub.f32 %v204, %v277
    %v298 = vsub.f32 %v209, %v292
    %v299 = vsub.f32 %v214, %v277
    %v300 = vsub.f32 %v219, %v292
    %v301 = vsub.f32 %v224, %v277
    %v302 = vsub.f32 %v229, %v292
    %v303 = vsub.f32 %v234, %v277
    %v304 = vsub.f32 %v239, %v292
    %v305 = vsub.f32 %v244, %v277
    %v306 = vsub.f32 %v249, %v292
    %v307 = vsub.f32 %v254, %v277
    %v308 = vsub.f32 %v259, %v292
    %v309 = vmul.f32 %v293, 1.442695
    %v310 = vpow.pop %v309
    %v311 = vmul.f32 %v294, 1.442695
    %v312 = vpow.pop %v311
    %v313 = vmul.f32 %v295, 1.442695
    %v314 = vpow.pop %v313
    %v315 = vmul.f32 %v296, 1.442695
    %v316 = vpow.pop %v315
    %v317 = vmul.f32 %v297, 1.442695
    %v318 = vpow.pop %v317
    %v319 = vmul.f32 %v298, 1.442695
    %v320 = vpow.pop %v319
    %v321 = vmul.f32 %v299, 1.442695
    %v322 = vpow.pop %v321
    %v323 = vmul.f32 %v300, 1.442695
    %v324 = vpow.pop %v323
    %v325 = vmul.f32 %v301, 1.442695
    %v326 = vpow.pop %v325
    %v327 = vmul.f32 %v302, 1.442695
    %v328 = vpow.pop %v327
    %v329 = vmul.f32 %v303, 1.442695
    %v330 = vpow.pop %v329
    %v331 = vmul.f32 %v304, 1.442695
    %v332 = vpow.pop %v331
    %v333 = vmul.f32 %v305, 1.442695
    %v334 = vpow.pop %v333
    %v335 = vmul.f32 %v306, 1.442695
    %v336 = vpow.pop %v335
    %v337 = vmul.f32 %v307, 1.442695
    %v338 = vpow.pop %v337
    %v339 = vmul.f32 %v308, 1.442695
    %v340 = vpow.pop %v339
    %v341 = vsel %vm262, %v310, 0.0
    %v342 = vsel %vm262, %v314, 0.0
    %v343 = vadd.f32 %v341, %v342
    %v344 = vsel %vm262, %v318, 0.0
    %v345 = vadd.f32 %v343, %v344
    %v346 = vsel %vm262, %v322, 0.0
    %v347 = vadd.f32 %v345, %v346
    %v348 = vsel %vm262, %v326, 0.0
    %v349 = vadd.f32 %v347, %v348
    %v350 = vsel %vm262, %v330, 0.0
    %v351 = vadd.f32 %v349, %v350
    %v352 = vsel %vm262, %v334, 0.0
    %v353 = vadd.f32 %v351, %v352
    %v354 = vsel %vm262, %v338, 0.0
    %v355 = vadd.f32 %v353, %v354
    %v356 = vsel %vm262, %v312, 0.0
    %v357 = vsel %vm262, %v316, 0.0
    %v358 = vadd.f32 %v356, %v357
    %v359 = vsel %vm262, %v320, 0.0
    %v360 = vadd.f32 %v358, %v359
    %v361 = vsel %vm262, %v324, 0.0
    %v362 = vadd.f32 %v360, %v361
    %v363 = vsel %vm262, %v328, 0.0
    %v364 = vadd.f32 %v362, %v363
    %v365 = vsel %vm262, %v332, 0.0
    %v366 = vadd.f32 %v364, %v365
    %v367 = vsel %vm262, %v336, 0.0
    %v368 = vadd.f32 %v366, %v367
    %v369 = vsel %vm262, %v340, 0.0
    %v370 = vadd.f32 %v368, %v369
    %v371 = vrcp.pop %v355
    %v372 = vmul.f32 %v310, %v371
    %v373 = vrcp.pop %v370
    %v374 = vmul.f32 %v312, %v373
    %v375 = vmul.f32 %v314, %v371
    %v376 = vmul.f32 %v316, %v373
    %v377 = vmul.f32 %v318, %v371
    %v378 = vmul.f32 %v320, %v373
    %v379 = vmul.f32 %v322, %v371
    %v380 = vmul.f32 %v324, %v373
    %v381 = vmul.f32 %v326, %v371
    %v382 = vmul.f32 %v328, %v373
    %v383 = vmul.f32 %v330, %v371
    %v384 = vmul.f32 %v332, %v373
    %v385 = vmul.f32 %v334, %v371
    %v386 = vmul.f32 %v336, %v373
    %v387 = vmul.f32 %v338, %v371
    %v388 = vmul.f32 %v340, %v373
    %389 = vst.msk [vmem:[%s3] sm:$0xff] %vm262, %v372
    %390 = vst.msk [vmem:[%s3 + $0x8] sm:$0xff] %vm262, %v374
    %391 = vst.msk [vmem:[%s3 + $0x10] sm:$0xff] %vm262, %v375
    %392 = vst.msk [vmem:[%s3 + $0x18] sm:$0xff] %vm262, %v376
    %393 = vst.msk [vmem:[%s3 + $0x20] sm:$0xff] %vm262, %v377
    %394 = vst.msk [vmem:[%s3 + $0x28] sm:$0xff] %vm262, %v378
    %395 = vst.msk [vmem:[%s3 + $0x30] sm:$0xff] %vm262, %v379
    %396 = vst.msk [vmem:[%s3 + $0x38] sm:$0xff] %vm262, %v380
    %397 = vst.msk [vmem:[%s3 + $0x40] sm:$0xff] %vm262, %v381
    %398 = vst.msk [vmem:[%s3 + $0x48] sm:$0xff] %vm262, %v382
    %399 = vst.msk [vmem:[%s3 + $0x50] sm:$0xff] %vm262, %v383
    %400 = vst.msk [vmem:[%s3 + $0x58] sm:$0xff] %vm262, %v384
    %401 = vst.msk [vmem:[%s3 + $0x60] sm:$0xff] %vm262, %v385
    %402 = vst.msk [vmem:[%s3 + $0x68] sm:$0xff] %vm262, %v386
    %403 = vst.msk [vmem:[%s3 + $0x70] sm:$0xff] %vm262, %v387
    %404 = vst.msk [vmem:[%s3 + $0x78] sm:$0xff] %vm262, %v388
    // Predicated region
    $region18: #{tpu_custom_call.1} parent=1 // pred_check
      _
    $region19: #{tpu_custom_call.1} parent=1 // pred_check_branch
      %406 = sbr.rel (0) target = $region21
    $region20: #{tpu_custom_call.1} parent=1 // pred_region
      _
    $region21: #{tpu_custom_call.1} parent=1 // pred_fallthru
      _
    // Predicated region
    $region22: #{tpu_custom_call.1} parent=1 // pred_check
      _
    $region23: #{tpu_custom_call.1} parent=1 // pred_check_branch
      %408 = sbr.rel (0) target = $region25
    $region24: #{tpu_custom_call.1} parent=1 // pred_region
      _
    $region25: #{tpu_custom_call.1} parent=1 // pred_fallthru
      _
    %409 = vsyncpa [#allocation3], 1

</llo_original>
